<compile_context>
chip_gen: v6e
topology: v6e:2x2x1
jax: 0.10.0
libtpu: 0.0.40
codegen_flags: <defaults>
</compile_context>

<pallas_src>
import functools

import jax
import jax.numpy as jnp
from jax.experimental import pallas as pl
from jax.experimental.pallas import tpu as pltpu


# -----------------------------------------------------------------------------
# Stage 1: tiled global average pool over the spatial axis.
# -----------------------------------------------------------------------------
def _pool_kernel(x_ref, o_ref, *, inv_hw):
    # x_ref: (bc_tile, hw_tile) native dtype; o_ref: (bc_tile, 1) f32,
    # resident across the reduction (hw) grid axis.
    j = pl.program_id(1)

    @pl.when(j == 0)
    def _():
        o_ref[...] = jnp.zeros_like(o_ref)

    x = x_ref[...].astype(jnp.float32)               # upcast in vregs, not on host
    o_ref[...] += jnp.sum(x, axis=-1, keepdims=True)

    @pl.when(j == pl.num_programs(1) - 1)
    def _():
        o_ref[...] = o_ref[...] * jnp.float32(inv_hw)


# -----------------------------------------------------------------------------
# Stage 2: k-tap conv along channels (zero padded) + sigmoid on (B, C).
# -----------------------------------------------------------------------------
def _gate_kernel(w_ref, y_ref, o_ref, *, k):
    # w_ref: (k,) conv taps in SMEM;  y_ref: (B, C) f32 pooled;  o_ref: (B, C).
    y = y_ref[...]
    b, c = y.shape
    pad = (k - 1) // 2
    ch = jax.lax.broadcasted_iota(jnp.int32, (b, c), dimension=1)

    acc = jnp.zeros((b, c), jnp.float32)
    for j in range(k):                               # k is small & static -> unrolled
        d = j - pad                                  # tap offset along channel axis
        shifted = jnp.roll(y, shift=-d, axis=1)      # shifted[b, i] = y[b, (i+d) % C]
        valid = (ch + d >= 0) & (ch + d < c)         # zero padding at borders
        acc = acc + w_ref[j] * jnp.where(valid, shifted, jnp.float32(0.0))

    o_ref[...] = jax.nn.sigmoid(acc).astype(o_ref.dtype)


def _pick_tile(dim, unit, max_tile):
    """Largest multiple of `unit` that divides `dim` and is <= max_tile,
    otherwise the full dim (allowed by BlockSpec when block == full array dim)."""
    best = None
    t = unit
    while t <= min(dim, max_tile):
        if dim % t == 0:
            best = t
        t += unit
    return dim if best is None else best


def eca_forward(x, weight, *, max_bc_tile=256, max_hw_tile=2048):
    """x: (B, C, H, W) float dtype, weight: (1, 1, k) -> gate (B, C, 1, 1)."""
    b, c, h, w = x.shape
    k = weight.shape[-1]
    bc, hw = b * c, h * w
    x2 = x.reshape(bc, hw)                     # free reshape; keeps native dtype

    itemsize = jnp.dtype(x.dtype).itemsize
    sublane = max(8, 32 // max(itemsize, 1))   # 8 (f32) / 16 (bf16) / 32 (int8)
    bc_tile = _pick_tile(bc, sublane, max_bc_tile)
    hw_tile = _pick_tile(hw, 128, max_hw_tile)
    grid = (bc // bc_tile, hw // hw_tile)      # reduction (hw) axis last

    pooled = pl.pallas_call(
        functools.partial(_pool_kernel, inv_hw=1.0 / float(hw)),
        out_shape=jax.ShapeDtypeStruct((bc, 1), jnp.float32),
        grid=grid,
        in_specs=[pl.BlockSpec((bc_tile, hw_tile), lambda i, j: (i, j))],
        out_specs=pl.BlockSpec((bc_tile, 1), lambda i, j: (i, 0)),
        compiler_params=pltpu.CompilerParams(
            dimension_semantics=("parallel", "arbitrary")),
        cost_estimate=pl.CostEstimate(
            flops=bc * hw,
            transcendentals=0,
            bytes_accessed=itemsize * bc * hw + 4 * bc),
    )(x2)

    w_flat = weight.reshape(k).astype(jnp.float32)
    gate = pl.pallas_call(
        functools.partial(_gate_kernel, k=k),
        out_shape=jax.ShapeDtypeStruct((b, c), x.dtype),
        grid=(1,),
        in_specs=[
            pl.BlockSpec(memory_space=pltpu.SMEM),            # conv taps (scalars)
            pl.BlockSpec((b, c), lambda i: (0, 0)),           # pooled (B, C)
        ],
        out_specs=pl.BlockSpec((b, c), lambda i: (0, 0)),
        cost_estimate=pl.CostEstimate(
            flops=2 * b * c * k,
            transcendentals=b * c,
            bytes_accessed=4 * (2 * b * c + k)),
    )(w_flat, pooled.reshape(b, c))

    return gate.reshape(b, c, 1, 1)


# -----------------------------------------------------------------------------
# Pure-JAX reference (same math as the PyTorch module).
# -----------------------------------------------------------------------------
def eca_reference(x, weight):
    b, c, h, w = x.shape
    k = weight.shape[-1]
    pad = (k - 1) // 2
    y = jnp.mean(x.astype(jnp.float32), axis=(2, 3))          # (B, C)
    y_pad = jnp.pad(y, ((0, 0), (pad, pad)))
    taps = weight.reshape(k).astype(jnp.float32)
    out = sum(taps[j] * y_pad[:, j:j + c] for j in range(k))  # cross-correlation
    return jax.nn.sigmoid(out).reshape(b, c, 1, 1)


if __name__ == "__main__":
    key = jax.random.PRNGKey(0)
    kx, kw, kx2 = jax.random.split(key, 3)

    # --- required small-shape test (f32) ---------------------------------------
    B, C, H, W = 2, 4, 16, 16
    K = 3  # eca kernel_size
    x = jax.random.normal(kx, (B, C, H, W), dtype=jnp.float32)
    bound = 1.0 / (K ** 0.5)   # PyTorch Conv1d kaiming-uniform bound, fan_in = K
    weight = jax.random.uniform(kw, (1, 1, K), jnp.float32, -bound, bound)

    y = eca_forward(x, weight)
    jax.block_until_ready(y)
    assert y.shape == (B, C, 1, 1)
    y_ref = eca_reference(x, weight)
    assert bool(jnp.allclose(y, y_ref, rtol=1e-5, atol=1e-5))

    # --- larger bf16 test: native-dtype DMA + multi-step tiled reduction -------
    B2, C2, H2, W2 = 2, 16, 64, 64
    x2 = jax.random.normal(kx2, (B2, C2, H2, W2), jnp.float32).astype(jnp.bfloat16)
    y2 = eca_forward(x2, weight, max_hw_tile=1024)   # grid = (1, 4): 4 reduction steps
    jax.block_until_ready(y2)
    assert y2.shape == (B2, C2, 1, 1)
    y2_ref = eca_reference(x2, weight)
    assert bool(jnp.allclose(y2.astype(jnp.float32), y2_ref, rtol=3e-2, atol=3e-2))

    print("KERNEL_OK")
</pallas_src>

<mosaic_0001>
module attributes {stable_mosaic.version = 11 : i64} {
  func.func @_pool_kernel(%arg0: i32, %arg1: i32, %arg2: memref<8x256xf32, #tpu.memory_space<vmem>>, %arg3: memref<8x1xf32, #tpu.memory_space<vmem>>) attributes {dimension_semantics = [#tpu.dimension_semantics<parallel>, #tpu.dimension_semantics<arbitrary>], iteration_bounds = array<i64: 1, 1>, scalar_prefetch = 0 : i64, scratch_operands = 0 : i64, tpu.core_type = #tpu.core_type<tc>, window_params = [{transform_indices = @transform_0, window_bounds = array<i64: 8, 256>}, {transform_indices = @transform_1, window_bounds = array<i64: 8, 1>}]} {
    %c0_i32 = arith.constant 0 : i32
    %0 = arith.cmpi eq, %arg1, %c0_i32 : i32
    %1 = arith.extui %0 : i1 to i32
    %c0_i32_0 = arith.constant 0 : i32
    %2 = arith.cmpi ne, %1, %c0_i32_0 : i32
    scf.if %2 {
      %cst_8 = arith.constant 0.000000e+00 : f32
      %12 = vector.broadcast %cst_8 : f32 to vector<8x1xf32>
      %c0_9 = arith.constant 0 : index
      %c0_10 = arith.constant 0 : index
      %13 = vector.load %arg3[%c0_9, %c0_10] : memref<8x1xf32, #tpu.memory_space<vmem>>, vector<8x1xf32>
      tpu.vector_store %arg3[%c0_9, %c0_10], %12 {strides = array<i32>} : memref<8x1xf32, #tpu.memory_space<vmem>>, vector<8x1xf32>,
    } else {
    }
    %c0 = arith.constant 0 : index
    %c0_1 = arith.constant 0 : index
    %3 = vector.load %arg2[%c0, %c0_1] : memref<8x256xf32, #tpu.memory_space<vmem>>, vector<8x256xf32>
    %c0_2 = arith.constant 0 : index
    %c0_3 = arith.constant 0 : index
    %4 = vector.load %arg3[%c0_2, %c0_3] : memref<8x1xf32, #tpu.memory_space<vmem>>, vector<8x1xf32>
    %cst = arith.constant dense<0.000000e+00> : vector<8xf32>
    %5 = vector.multi_reduction <add>, %3, %cst [1] : vector<8x256xf32> to vector<8xf32>
    %6 = vector.shape_cast %5 : vector<8xf32> to vector<8x1xf32>
    %7 = arith.addf %4, %6 : vector<8x1xf32>
    %c0_4 = arith.constant 0 : index
    %c0_5 = arith.constant 0 : index
    %8 = vector.load %arg3[%c0_4, %c0_5] : memref<8x1xf32, #tpu.memory_space<vmem>>, vector<8x1xf32>
    tpu.vector_store %arg3[%c0_4, %c0_5], %7 {strides = array<i32>} : memref<8x1xf32, #tpu.memory_space<vmem>>, vector<8x1xf32>,
    %c0_i32_6 = arith.constant 0 : i32
    %9 = arith.cmpi eq, %arg1, %c0_i32_6 : i32
    %10 = arith.extui %9 : i1 to i32
    %c0_i32_7 = arith.constant 0 : i32
    %11 = arith.cmpi ne, %10, %c0_i32_7 : i32
    scf.if %11 {
      %c0_8 = arith.constant 0 : index
      %c0_9 = arith.constant 0 : index
      %12 = vector.load %arg3[%c0_8, %c0_9] : memref<8x1xf32, #tpu.memory_space<vmem>>, vector<8x1xf32>
      %cst_10 = arith.constant 3.906250e-03 : f32
      %13 = vector.broadcast %cst_10 : f32 to vector<8x1xf32>
      %14 = arith.mulf %12, %13 : vector<8x1xf32>
      %c0_11 = arith.constant 0 : index
      %c0_12 = arith.constant 0 : index
      %15 = vector.load %arg3[%c0_11, %c0_12] : memref<8x1xf32, #tpu.memory_space<vmem>>, vector<8x1xf32>
      tpu.vector_store %arg3[%c0_11, %c0_12], %14 {strides = array<i32>} : memref<8x1xf32, #tpu.memory_space<vmem>>, vector<8x1xf32>,
    } else {
    }
    return
  }
  func.func @transform_0(%arg0: i32, %arg1: i32) -> (i32, i32) {
    %c0_i32 = arith.constant 0 : i32
    return %arg0, %arg1 : i32, i32
  }
  func.func @transform_1(%arg0: i32, %arg1: i32) -> (i32, i32) {
    %c0_i32 = arith.constant 0 : i32
    %c0_i32_0 = arith.constant 0 : i32
    return %arg0, %c0_i32 : i32, i32
  }
}

</mosaic_0001>

<llo_original>
// kernel: tpu_custom_call.1
$region0: #{tpu_custom_call.1}
  #allocation0 [shape = 'u32[]', space=smem, size = 0x4, offset = 0x4, fixed_abs, tag = 'smem constant byte address 0x4 - core index']
  #allocation1 [shape = 'u32[144,128]{1,0:T(1,128)}', space=vmem, size = 0x12000, scoped, tag = 'internal scratch']
  %s0 = inlined_call_operand.hbm [shape: f32[8,256], index: 0, kind: input, shape index: {}]
  %s1 = inlined_call_operand.vmem [shape: f32[8,1], index: 1, kind: output, shape index: {}]
  %s2 = sld [smem:[#allocation0]]
  $region26: #{tpu_custom_call.1} parent=0
    _
  %s4 = ssub.s32 1, %s2
  %s5 = scalar_select 0, %s4, %s2
  $region1: #{tpu_custom_call.1} parent=0
    #allocation2 [shape = 'u8[8192]{0}', space=vmem, size = 0x2000, scoped, tag = 'input window, operand 0, single buffered']
    #allocation3 [shape = 's32[1]{0}', space=sflag, size = 0x4, scoped, tag = 'scoped memory for tpu_custom_call.1']
    %6 = vsyncpa [#allocation3], 0
    // Predicated region
    $region2: #{tpu_custom_call.1} parent=1 // pred_check
      _
    $region3: #{tpu_custom_call.1} parent=1 // pred_check_branch
      %8 = sbr.rel (0) target = $region5
    $region4: #{tpu_custom_call.1} parent=1 // pred_region
      %s10 = ssub.s32 256, 256
      %11 = vsyncadd [#allocation3], %s10
      %s13 = sshll.u32 [#allocation2], 4
      %s14 = int_to_ptr.vmem [resolvable:$true] %s13
      %16 = dma.hbm_to_vmem [thread:$0]  %s0, 256, %s14, [#allocation3]
    $region5: #{tpu_custom_call.1} parent=1 // pred_fallthru
      _
    // Predicated region
    $region6: #{tpu_custom_call.1} parent=1 // pred_check
      _
    $region7: #{tpu_custom_call.1} parent=1 // pred_check_branch
      %18 = sbr.rel (0) target = $region9
    $region8: #{tpu_custom_call.1} parent=1 // pred_region
      %19 = dma.done [#allocation3], 256
    $region9: #{tpu_custom_call.1} parent=1 // pred_fallthru
      _
    %p20 = scmp.eq.s32.totalorder 0, 0
    // Predicated region
    $region10: #{tpu_custom_call.1} parent=1 // pred_check
      %p21 = pneg %p20
    $region11: #{tpu_custom_call.1} parent=1 // pred_check_branch
      %23 = sbr.rel (%p21) target = $region13
    $region12: #{tpu_custom_call.1} parent=1 // pred_region
      %vm24 = vcmask 7168
      %25 = vst.msk [vmem:[%s1] sm:$0xff] %vm24, 0.0
    $region13: #{tpu_custom_call.1} parent=1 // pred_fallthru
      _
    %v26 = vld [vmem:[#allocation2] sm:$0xff]
    %v27 = vld [vmem:[#allocation2 + $0x8] sm:$0xff]
    %v28 = vld [vmem:[%s1] sm:$0xff]
    %v29 = vadd.f32 %v26, %v27
    %30 = vadd.xlane.f32.xlu0 %v29
    %v31 = vpop.xlane.xlu0 %30
    %v32 = vadd.f32 %v28, %v31
    %vm33 = vcmask 7168
    %34 = vst.msk [vmem:[%s1] sm:$0xff] %vm33, %v32
    // Predicated region
    $region14: #{tpu_custom_call.1} parent=1 // pred_check
      %p35 = pneg %p20
    $region15: #{tpu_custom_call.1} parent=1 // pred_check_branch
      %37 = sbr.rel (%p35) target = $region17
    $region16: #{tpu_custom_call.1} parent=1 // pred_region
      %v38 = vld [vmem:[%s1] sm:$0xff]
      %v39 = vmul.f32 %v38, 0.00390625
      %40 = vst.msk [vmem:[%s1] sm:$0xff] %vm33, %v39
    $region17: #{tpu_custom_call.1} parent=1 // pred_fallthru
      _
    // Predicated region
    $region18: #{tpu_custom_call.1} parent=1 // pred_check
      _
    $region19: #{tpu_custom_call.1} parent=1 // pred_check_branch
      %42 = sbr.rel (0) target = $region21
    $region20: #{tpu_custom_call.1} parent=1 // pred_region
      _
    $region21: #{tpu_custom_call.1} parent=1 // pred_fallthru
      _
    // Predicated region
    $region22: #{tpu_custom_call.1} parent=1 // pred_check
      _
    $region23: #{tpu_custom_call.1} parent=1 // pred_check_branch
      %44 = sbr.rel (0) target = $region25
    $region24: #{tpu_custom_call.1} parent=1 // pred_region
      _
    $region25: #{tpu_custom_call.1} parent=1 // pred_fallthru
      _
    %45 = vsyncpa [#allocation3], 1

</llo_original>
